<compile_context>
chip_gen: v7x
topology: tpu7x:2x2x1
jax: 0.10.0
libtpu: 0.0.40
codegen_flags: <defaults>
</compile_context>

<pallas_src>
import functools
import math

import jax
import jax.numpy as jnp
from jax.experimental import pallas as pl
from jax.experimental.pallas import tpu as pltpu


_TARGET_BLOCK_BYTES = 8 * 1024 * 1024   # ~8 MiB of input per grid step


def _round_up(x, m):
    return ((x + m - 1) // m) * m


def _vmem_capacity_bytes():
    """Physical VMEM per TensorCore; conservative fallback = v7x's 64 MiB."""
    try:
        cap = getattr(pltpu.get_tpu_info(), "vmem_capacity_bytes", None)
        if cap:
            return int(cap)
    except Exception:
        pass
    return 64 * 1024 * 1024


def _num_tensorcores():
    """TensorCores per chip (1 on v5e/v6e, 2 on v7x); safe fallback = 1."""
    try:
        info = pltpu.get_tpu_info()
        for attr in ("num_cores", "tensorcore_count", "num_tensorcores", "core_count"):
            n = getattr(info, attr, None)
            if isinstance(n, int) and n > 0:
                return n
    except Exception:
        pass
    try:
        n = getattr(jax.devices()[0], "num_cores", None)
        if isinstance(n, int) and n > 0:
            return n
    except Exception:
        pass
    return 1


def _rmsnorm_kernel(x_ref, w_ref, o_ref, *, eps, inv_hidden):
    # x_ref: (row_tile, H)   w_ref: (1, H)   o_ref: (row_tile, H)
    x = x_ref[...].astype(jnp.float32)
    ss = jnp.sum(x * x, axis=-1, keepdims=True)            # XLU lane reduce
    inv = jax.lax.rsqrt(ss * inv_hidden + eps)              # EUP slot
    out = w_ref[...].astype(jnp.float32) * (x * inv)        # VPU
    o_ref[...] = out.astype(o_ref.dtype)


def spacebyte_rmsnorm(
    x,
    weight,
    eps=1e-6,
    *,
    row_tile=None,
    out_dtype=None,     # None -> match x.dtype; jnp.float32 for strict torch parity
    num_cores=None,     # None -> auto-detect; gates the megacore split
):
    """x: (..., H); weight: (H,). Returns (..., H)."""
    orig_shape = x.shape
    H = int(orig_shape[-1])
    rows = int(math.prod(orig_shape[:-1])) if len(orig_shape) > 1 else 1
    x2d = x.reshape(rows, H)
    w2d = weight.reshape(1, H)

    if out_dtype is None:
        out_dtype = x.dtype
    in_bytes = jnp.dtype(x.dtype).itemsize
    out_bytes = jnp.dtype(out_dtype).itemsize
    w_bytes = jnp.dtype(weight.dtype).itemsize
    # Sublane granularity: 8 rows for 32-bit, 16 when any 16-bit dtype is in play.
    gran = 8 if min(in_bytes, out_bytes) >= 4 else 16

    # --- Chip-aware VMEM sizing (budget consistent with the compiler limit) ---
    vmem_cap = _vmem_capacity_bytes()
    # ~64 MiB on 128-MiB parts (v5e/v6e), ~40 MiB on v7x's 64-MiB VMEM.
    vmem_limit = max(32 * 1024 * 1024, min((vmem_cap * 5) // 8, 64 * 1024 * 1024))
    budget = (vmem_limit * 3) // 4   # headroom for weight block + compiler temps

    # Per-row footprint: double-buffered input + output blocks plus one f32
    # intermediate (the upcast / x*x temporary inside the kernel body).
    per_row_bytes = H * (2 * (in_bytes + out_bytes) + 4)
    max_rows_fit = (budget // per_row_bytes // gran) * gran
    if max_rows_fit < gran:
        # TODO(synk): add a hidden-axis grid split (reduction axis last,
        # "arbitrary", with a per-row partial-sum scratch) for H so wide that
        # even a gran-row tile exceeds the VMEM budget.
        max_rows_fit = gran

    if row_tile is None:
        # Bytes-based block target instead of a fixed row cap.
        target = (_TARGET_BLOCK_BYTES // max(1, H * in_bytes) // gran) * gran
        row_tile = max(gran, min(max(gran, target), max_rows_fit))
    else:
        row_tile = max(gran, _round_up(int(row_tile), gran))
        row_tile = min(row_tile, max_rows_fit)

    # No bigger than the (sublane-rounded) problem itself.
    row_tile = min(row_tile, _round_up(rows, gran))

    # Megacore: only force extra blocks when there is >1 TensorCore, and then
    # aim for >= 2 blocks per core so each core's double-buffer has >= 2 steps.
    n_cores = _num_tensorcores() if num_cores is None else int(num_cores)
    if n_cores > 1 and rows > gran:
        cap = max(gran, _round_up(pl.cdiv(rows, 2 * n_cores), gran))
        row_tile = min(row_tile, cap)

    grid_rows = pl.cdiv(rows, row_tile)

    cost = pl.CostEstimate(
        flops=3 * rows * H,
        transcendentals=rows,
        bytes_accessed=rows * H * (in_bytes + out_bytes) + H * w_bytes,
    )

    out = pl.pallas_call(
        functools.partial(_rmsnorm_kernel, eps=float(eps), inv_hidden=1.0 / H),
        out_shape=jax.ShapeDtypeStruct((rows, H), out_dtype),
        grid_spec=pltpu.PrefetchScalarGridSpec(
            num_scalar_prefetch=0,
            grid=(grid_rows,),
            in_specs=[
                # Rows: partial last block is fine (rows independent, OOB
                # writes masked).  Hidden: full-extent block == array dim, so
                # the lane reduction only sees real elements (no pad needed).
                pl.BlockSpec((row_tile, H), lambda i: (i, 0)),
                # Weight tile is constant across the grid -> fetched once,
                # stays resident; all remaining DMA BW goes to activations.
                pl.BlockSpec((1, H), lambda i: (0, 0)),
            ],
            out_specs=pl.BlockSpec((row_tile, H), lambda i: (i, 0)),
        ),
        compiler_params=pltpu.CompilerParams(
            dimension_semantics=("parallel",),
            vmem_limit_bytes=vmem_limit,
        ),
        cost_estimate=cost,
    )(x2d, w2d)

    return out.reshape(orig_shape)


def _reference(x, weight, eps=1e-6):
    x_f32 = x.astype(jnp.float32)
    variance = jnp.mean(x_f32 * x_f32, axis=-1, keepdims=True)
    hs = x_f32 * jax.lax.rsqrt(variance + eps)
    return weight.astype(jnp.float32) * hs


if __name__ == "__main__":
    batch, seq, hidden = 2, 8, 32
    key = jax.random.PRNGKey(0)
    x = jax.random.normal(key, (batch, seq, hidden), dtype=jnp.float32)
    # nn.Parameter(torch.ones(hidden_size)) -> deterministic ones
    weight = jnp.ones((hidden,), dtype=jnp.float32)

    out = spacebyte_rmsnorm(x, weight, eps=1e-6)
    out = jax.block_until_ready(out)

    ref = _reference(x, weight, eps=1e-6)
    assert out.shape == x.shape
    assert out.dtype == jnp.float32          # f32 in -> f32 out (torch parity)
    assert jnp.allclose(out, ref, atol=1e-5, rtol=1e-5)
    print("KERNEL_OK")
</pallas_src>

<mosaic_0001>
module attributes {stable_mosaic.version = 11 : i64} {
  func.func @_rmsnorm_kernel(%arg0: i32, %arg1: memref<16x32xf32, #tpu.memory_space<vmem>>, %arg2: memref<1x32xf32, #tpu.memory_space<vmem>>, %arg3: memref<16x32xf32, #tpu.memory_space<vmem>>) attributes {dimension_semantics = [#tpu.dimension_semantics<parallel>], iteration_bounds = array<i64: 1>, scalar_prefetch = 0 : i64, scratch_operands = 0 : i64, tpu.core_type = #tpu.core_type<tc>, window_params = [{transform_indices = @transform_0, window_bounds = array<i64: 16, 32>}, {pipeline_mode = #tpu.pipeline_mode<synchronous>, transform_indices = @transform_1, window_bounds = array<i64: 1, 32>}, {transform_indices = @transform_2, window_bounds = array<i64: 16, 32>}]} {
    %c0 = arith.constant 0 : index
    %c0_0 = arith.constant 0 : index
    %0 = vector.load %arg1[%c0, %c0_0] : memref<16x32xf32, #tpu.memory_space<vmem>>, vector<16x32xf32>
    %1 = arith.mulf %0, %0 : vector<16x32xf32>
    %cst = arith.constant dense<0.000000e+00> : vector<16xf32>
    %2 = vector.multi_reduction <add>, %1, %cst [1] : vector<16x32xf32> to vector<16xf32>
    %3 = vector.shape_cast %2 : vector<16xf32> to vector<16x1xf32>
    %cst_1 = arith.constant 3.125000e-02 : f32
    %4 = vector.broadcast %cst_1 : f32 to vector<16x1xf32>
    %5 = arith.mulf %3, %4 : vector<16x1xf32>
    %cst_2 = arith.constant 9.99999997E-7 : f32
    %6 = vector.broadcast %cst_2 : f32 to vector<16x1xf32>
    %7 = arith.addf %5, %6 : vector<16x1xf32>
    %8 = math.rsqrt %7 : vector<16x1xf32>
    %c0_3 = arith.constant 0 : index
    %c0_4 = arith.constant 0 : index
    %9 = vector.load %arg2[%c0_3, %c0_4] : memref<1x32xf32, #tpu.memory_space<vmem>>, vector<1x32xf32>
    %10 = vector.broadcast %8 : vector<16x1xf32> to vector<16x32xf32>
    %11 = arith.mulf %0, %10 : vector<16x32xf32>
    %12 = vector.broadcast %9 : vector<1x32xf32> to vector<16x32xf32>
    %13 = arith.mulf %12, %11 : vector<16x32xf32>
    %c0_5 = arith.constant 0 : index
    %c0_6 = arith.constant 0 : index
    %14 = vector.load %arg3[%c0_5, %c0_6] : memref<16x32xf32, #tpu.memory_space<vmem>>, vector<16x32xf32>
    tpu.vector_store %arg3[%c0_5, %c0_6], %13 {strides = array<i32>} : memref<16x32xf32, #tpu.memory_space<vmem>>, vector<16x32xf32>,
    return
  }
  func.func @transform_0(%arg0: i32) -> (i32, i32) {
    %c0_i32 = arith.constant 0 : i32
    %c0_i32_0 = arith.constant 0 : i32
    return %arg0, %c0_i32 : i32, i32
  }
  func.func @transform_1(%arg0: i32) -> (i32, i32) {
    %c0_i32 = arith.constant 0 : i32
    %c0_i32_0 = arith.constant 0 : i32
    %c0_i32_1 = arith.constant 0 : i32
    return %c0_i32, %c0_i32_0 : i32, i32
  }
  func.func @transform_2(%arg0: i32) -> (i32, i32) {
    %c0_i32 = arith.constant 0 : i32
    %c0_i32_0 = arith.constant 0 : i32
    return %arg0, %c0_i32 : i32, i32
  }
}

</mosaic_0001>

<llo_original>
// kernel: tpu_custom_call.1
$region0: #{tpu_custom_call.1}
  #allocation0 [shape = 'u32[]', space=smem, size = 0x4, offset = 0x4, fixed_abs, tag = 'smem constant byte address 0x4 - core index']
  #allocation1 [shape = 'u32[144,128]{1,0:T(1,128)}', space=vmem, size = 0x12000, scoped, tag = 'internal scratch']
  %s0 = inlined_call_operand.hbm [shape: f32[16,32], index: 0, kind: input, shape index: {}]
  %s1 = inlined_call_operand.vmem [shape: f32[1,32], index: 1, kind: input, shape index: {}]
  %s2 = inlined_call_operand.hbm [shape: f32[16,32], index: 2, kind: output, shape index: {}]
  %s3 = sld [smem:[#allocation0]]
  $region22: #{tpu_custom_call.1} parent=0
    _
  %s5 = ssub.s32 1, %s3
  %s6 = scalar_select 0, %s5, %s3
  $region1: #{tpu_custom_call.1} parent=0
    #allocation2 [shape = 'u8[8192]{0}', space=vmem, size = 0x2000, scoped, tag = 'input window, operand 0, single buffered']
    #allocation3 [shape = 's32[1]{0}', space=sflag, size = 0x4, scoped, tag = 'scoped memory for tpu_custom_call.1']
    #allocation4 [shape = 's32[1]{0}', space=sflag, size = 0x4, scoped, tag = 'scoped memory for tpu_custom_call.1']
    #allocation5 [shape = 'u8[8192]{0}', space=vmem, size = 0x2000, scoped, tag = 'output window, operand 0, single buffered']
    %7 = vsyncpa [#allocation3], 0
    %8 = vsyncpa [#allocation4], 0
    // Predicated region
    $region2: #{tpu_custom_call.1} parent=1 // pred_check
      _
    $region3: #{tpu_custom_call.1} parent=1 // pred_check_branch
      %10 = sbr.rel (0) target = $region5
    $region4: #{tpu_custom_call.1} parent=1 // pred_region
      %s12 = ssub.s32 256, 256
      %13 = vsyncadd [#allocation3], %s12
      %s14 = sshll.u32 [#allocation2], 4
      %s15 = int_to_ptr.vmem [resolvable:$true] %s14
      %20 = dma.hbm_to_vmem [thread:$0]  %s0, 256, %s15, [#allocation3], 128, 128, 8
    $region5: #{tpu_custom_call.1} parent=1 // pred_fallthru
      _
    // Predicated region
    $region6: #{tpu_custom_call.1} parent=1 // pred_check
      _
    $region7: #{tpu_custom_call.1} parent=1 // pred_check_branch
      %22 = sbr.rel (0) target = $region9
    $region8: #{tpu_custom_call.1} parent=1 // pred_region
      _
    $region9: #{tpu_custom_call.1} parent=1 // pred_fallthru
      _
    // Predicated region
    $region10: #{tpu_custom_call.1} parent=1 // pred_check
      _
    $region11: #{tpu_custom_call.1} parent=1 // pred_check_branch
      %24 = sbr.rel (0) target = $region13
    $region12: #{tpu_custom_call.1} parent=1 // pred_region
      %25 = dma.done [#allocation3], 256
    $region13: #{tpu_custom_call.1} parent=1 // pred_fallthru
      _
    %v26 = vld [vmem:[#allocation2] sm:$0xff]
    %v27 = vld [vmem:[#allocation2 + $0x8] sm:$0xff]
    %v28 = vmul.f32 %v26, %v26
    %v29 = vmul.f32 %v27, %v27
    %vm30 = vcmask 261120
    %v31 = vsel %vm30, %v28, 0.0
    %32 = vadd.xlane.f32.xlu0 %v31
    %v33 = vpop.xlane.xlu0 %32
    %v34 = vsel %vm30, %v29, 0.0
    %35 = vadd.xlane.f32.xlu0 %v34
    %v36 = vpop.xlane.xlu0 %35
    %v37 = vmul.f32 %v33, 0.03125
    %v38 = vmul.f32 %v36, 0.03125
    %v39 = vadd.f32 %v37, 1e-06
    %v40 = vadd.f32 %v38, 1e-06
    %v41 = vrsqrt.pop %v39
    %v42 = vrsqrt.pop %v40
    %v43 = vld [vmem:[%s1] sm:$0x1]
    %v44 = vmul.f32 %v26, %v41
    %v45 = vmul.f32 %v27, %v42
    %v47 = vlaneseq
    %v48 = vshrl.u32 %v47, 7
    %v49 = vsub.s32 0, %v48
    %v50 = vrot.slane %v43, %v49
    %v52 = vmul.f32 %v50, %v44
    %v53 = vmul.f32 %v50, %v45
    %54 = vst.msk [vmem:[#allocation5] sm:$0xff] %vm30, %v52
    %55 = vst.msk [vmem:[#allocation5 + $0x8] sm:$0xff] %vm30, %v53
    // Predicated region
    $region14: #{tpu_custom_call.1} parent=1 // pred_check
      _
    $region15: #{tpu_custom_call.1} parent=1 // pred_check_branch
      %57 = sbr.rel (0) target = $region17
    $region16: #{tpu_custom_call.1} parent=1 // pred_region
      %s59 = ssub.s32 256, 256
      %60 = vsyncadd [#allocation4], %s59
      %s61 = sshll.u32 [#allocation5], 4
      %s62 = int_to_ptr.vmem [resolvable:$true] %s61
      %67 = dma.vmem_to_hbm [thread:$0]  %s62, 256, %s2, [#allocation4], 128, 128, 8
    $region17: #{tpu_custom_call.1} parent=1 // pred_fallthru
      _
    // Predicated region
    $region18: #{tpu_custom_call.1} parent=1 // pred_check
      _
    $region19: #{tpu_custom_call.1} parent=1 // pred_check_branch
      %69 = sbr.rel (0) target = $region21
    $region20: #{tpu_custom_call.1} parent=1 // pred_region
      %70 = dma.done [#allocation4], 256
    $region21: #{tpu_custom_call.1} parent=1 // pred_fallthru
      _
    %71 = vsyncpa [#allocation3], 1
    %72 = vsyncpa [#allocation4], 1

</llo_original>
